<compile_context>
chip_gen: v5e
topology: v5e:2x2
jax: 0.10.0
libtpu: 0.0.40
codegen_flags: <defaults>
</compile_context>

<pallas_src>
import jax
import jax.numpy as jnp
from jax.experimental import pallas as pl
from jax.experimental.pallas import tpu as pltpu


def _round_up(x, m):
    return ((x + m - 1) // m) * m


def gelu_mlp_kernel(x_ref, w1_ref, b1_ref, w2_ref, b2_ref, out_ref, acc_ref):
    """One (batch-tile, hidden-tile) step of out = fc2(gelu(fc1(x)))."""
    j = pl.program_id(1)  # hidden (reduction) axis

    @pl.when(j == 0)
    def _init():
        acc_ref[...] = jnp.zeros_like(acc_ref)

    # fc1 block: (tb, In) @ (In, th) on the MXU, f32 accumulation.
    h = jnp.dot(x_ref[...], w1_ref[...], preferred_element_type=jnp.float32)
    # Bias + GELU in f32. tanh-approx GELU -> EUP (PyTorch nn.GELU() default
    # is erf form; tanh approximation matches to ~1e-3).
    h = jax.nn.gelu(h + b1_ref[...], approximate=True)

    # fc2 partial: (tb, th) @ (th, Out), accumulated in f32 scratch.
    acc_ref[...] += jnp.dot(h.astype(w2_ref.dtype), w2_ref[...],
                            preferred_element_type=jnp.float32)

    @pl.when(j == pl.num_programs(1) - 1)
    def _finalize():
        out_ref[...] = (acc_ref[...] + b2_ref[...]).astype(out_ref.dtype)


def gelu_mlp_forward(x, w1, b1, w2, b2, *, batch_tile=256, hidden_tile=512,
                     mxu_dtype=jnp.bfloat16):
    """x: [B, In]; w1: [In, H] (pre-transposed); b1: [1, H];
    w2: [H, Out] (pre-transposed); b2: [1, Out].  Returns out: [B, Out]."""
    B, In = x.shape
    H, Out = w2.shape
    assert w1.shape == (In, H)
    assert batch_tile % 8 == 0
    assert hidden_tile % 128 == 0
    out_dtype = x.dtype

    # Tile / padding choices (sublane=8, lane=128 aligned).
    if B <= batch_tile:
        tb = _round_up(B, 8)
        B_pad = tb
    else:
        tb = batch_tile
        B_pad = _round_up(B, tb)
    if H <= hidden_tile:
        th = _round_up(H, 128)
        H_pad = th
    else:
        th = hidden_tile
        H_pad = _round_up(H, th)
    Out_pad = _round_up(Out, 128)

    cdtype = mxu_dtype if mxu_dtype is not None else x.dtype
    xp = jnp.pad(x, ((0, B_pad - B), (0, 0))).astype(cdtype)
    w1p = jnp.pad(w1, ((0, 0), (0, H_pad - H))).astype(cdtype)
    b1p = jnp.pad(b1.reshape(1, H),
                  ((0, 0), (0, H_pad - H))).astype(jnp.float32)
    w2p = jnp.pad(w2, ((0, H_pad - H), (0, Out_pad - Out))).astype(cdtype)
    b2p = jnp.pad(b2.reshape(1, Out),
                  ((0, 0), (0, Out_pad - Out))).astype(jnp.float32)

    grid = (B_pad // tb, H_pad // th)

    itemsize = jnp.dtype(cdtype).itemsize
    cost = pl.CostEstimate(
        flops=2 * B_pad * In * H_pad + 2 * B_pad * H_pad * Out_pad,
        transcendentals=B_pad * H_pad,
        bytes_accessed=(xp.size + w1p.size + w2p.size) * itemsize
        + (b1p.size + b2p.size) * 4
        + B_pad * Out_pad * jnp.dtype(out_dtype).itemsize,
    )

    out = pl.pallas_call(
        gelu_mlp_kernel,
        out_shape=jax.ShapeDtypeStruct((B_pad, Out_pad), out_dtype),
        grid_spec=pltpu.PrefetchScalarGridSpec(
            num_scalar_prefetch=0,
            grid=grid,
            in_specs=[
                pl.BlockSpec((tb, In), lambda i, j: (i, 0)),        # x tile
                pl.BlockSpec((In, th), lambda i, j: (0, j)),        # W1 hidden block
                pl.BlockSpec((1, th), lambda i, j: (0, j)),         # b1 hidden block
                pl.BlockSpec((th, Out_pad), lambda i, j: (j, 0)),   # W2 hidden block
                pl.BlockSpec((1, Out_pad), lambda i, j: (0, 0)),    # b2
            ],
            out_specs=pl.BlockSpec((tb, Out_pad), lambda i, j: (i, 0)),
            scratch_shapes=[pltpu.VMEM((tb, Out_pad), jnp.float32)],
        ),
        compiler_params=pltpu.CompilerParams(
            dimension_semantics=("parallel", "arbitrary"),
            vmem_limit_bytes=64 * 1024 * 1024),
        cost_estimate=cost,
    )(xp, w1p, b1p, w2p, b2p)

    return out[:B, :Out]


def init_params(key, input_size, hidden_size, output_size):
    """Deterministic init mimicking nn.Linear's uniform(-1/sqrt(fan_in), ...).
    Weights are stored pre-transposed as [in_features, out_features]."""
    k1, k2, k3, k4 = jax.random.split(key, 4)
    bound1 = 1.0 / jnp.sqrt(input_size)
    bound2 = 1.0 / jnp.sqrt(hidden_size)
    w1 = jax.random.uniform(k1, (input_size, hidden_size), jnp.float32,
                            -bound1, bound1)
    b1 = jax.random.uniform(k2, (1, hidden_size), jnp.float32, -bound1, bound1)
    w2 = jax.random.uniform(k3, (hidden_size, output_size), jnp.float32,
                            -bound2, bound2)
    b2 = jax.random.uniform(k4, (1, output_size), jnp.float32, -bound2, bound2)
    return w1, b1, w2, b2


if __name__ == "__main__":
    # Small but lane/sublane-aligned demo shapes; tiles chosen so the grid has
    # multiple steps on both axes (2 batch tiles x 2 hidden tiles).
    input_size, hidden_size, output_size = 128, 256, 128
    batch = 64

    key = jax.random.PRNGKey(0)
    kx, kp = jax.random.split(key)
    x = jax.random.normal(kx, (batch, input_size), jnp.float32)
    w1, b1, w2, b2 = init_params(kp, input_size, hidden_size, output_size)

    out = gelu_mlp_forward(x, w1, b1, w2, b2, batch_tile=32, hidden_tile=128)
    jax.block_until_ready(out)

    # Pure-JAX reference with the same bf16 MXU operand precision as the kernel.
    xb, w1b, w2b = (a.astype(jnp.bfloat16) for a in (x, w1, w2))
    h_ref = jax.nn.gelu(
        jnp.dot(xb, w1b, preferred_element_type=jnp.float32) + b1,
        approximate=True)
    out_ref = jnp.dot(h_ref.astype(jnp.bfloat16), w2b,
                      preferred_element_type=jnp.float32) + b2

    assert out.shape == (batch, output_size)
    assert jnp.allclose(out, out_ref.astype(out.dtype), atol=2e-2, rtol=2e-2), \
        "output mismatch vs reference"

    print("KERNEL_OK")
</pallas_src>

<mosaic_0001>
module attributes {stable_mosaic.version = 11 : i64} {
  func.func @gelu_mlp_kernel(%arg0: i32, %arg1: i32, %arg2: memref<32x128xbf16, #tpu.memory_space<vmem>>, %arg3: memref<128x128xbf16, #tpu.memory_space<vmem>>, %arg4: memref<1x128xf32, #tpu.memory_space<vmem>>, %arg5: memref<128x128xbf16, #tpu.memory_space<vmem>>, %arg6: memref<1x128xf32, #tpu.memory_space<vmem>>, %arg7: memref<32x128xf32, #tpu.memory_space<vmem>>, %arg8: memref<32x128xf32, #tpu.memory_space<vmem>>) attributes {dimension_semantics = [#tpu.dimension_semantics<parallel>, #tpu.dimension_semantics<arbitrary>], iteration_bounds = array<i64: 2, 2>, scalar_prefetch = 0 : i64, scratch_operands = 1 : i64, tpu.core_type = #tpu.core_type<tc>, window_params = [{transform_indices = @transform_0, window_bounds = array<i64: 32, 128>}, {transform_indices = @transform_1, window_bounds = array<i64: 128, 128>}, {transform_indices = @transform_2, window_bounds = array<i64: 1, 128>}, {transform_indices = @transform_3, window_bounds = array<i64: 128, 128>}, {pipeline_mode = #tpu.pipeline_mode<synchronous>, transform_indices = @transform_4, window_bounds = array<i64: 1, 128>}, {transform_indices = @transform_5, window_bounds = array<i64: 32, 128>}]} {
    %c0_i32 = arith.constant 0 : i32
    %0 = arith.cmpi eq, %arg1, %c0_i32 : i32
    %1 = arith.extui %0 : i1 to i32
    %c0_i32_0 = arith.constant 0 : i32
    %2 = arith.cmpi ne, %1, %c0_i32_0 : i32
    scf.if %2 {
      %cst_18 = arith.constant 0.000000e+00 : f32
      %31 = vector.broadcast %cst_18 : f32 to vector<32x128xf32>
      %c0_19 = arith.constant 0 : index
      %c0_20 = arith.constant 0 : index
      %32 = vector.load %arg8[%c0_19, %c0_20] : memref<32x128xf32, #tpu.memory_space<vmem>>, vector<32x128xf32>
      tpu.vector_store %arg8[%c0_19, %c0_20], %31 {strides = array<i32>} : memref<32x128xf32, #tpu.memory_space<vmem>>, vector<32x128xf32>,
    } else {
    }
    %c0 = arith.constant 0 : index
    %c0_1 = arith.constant 0 : index
    %3 = vector.load %arg2[%c0, %c0_1] : memref<32x128xbf16, #tpu.memory_space<vmem>>, vector<32x128xbf16>
    %c0_2 = arith.constant 0 : index
    %c0_3 = arith.constant 0 : index
    %4 = vector.load %arg3[%c0_2, %c0_3] : memref<128x128xbf16, #tpu.memory_space<vmem>>, vector<128x128xbf16>
    %cst = arith.constant dense<0.000000e+00> : vector<32x128xf32>
    %5 = tpu.matmul %3, %4, %cst {dimension_numbers = #tpu.dot_dimension_numbers<[1], [0], [0], [1], [0, 0, 1, 1], [], []>} : vector<32x128xbf16>, vector<128x128xbf16>, vector<32x128xf32> -> vector<32x128xf32>
    %c0_4 = arith.constant 0 : index
    %c0_5 = arith.constant 0 : index
    %6 = vector.load %arg4[%c0_4, %c0_5] : memref<1x128xf32, #tpu.memory_space<vmem>>, vector<1x128xf32>
    %7 = vector.broadcast %6 : vector<1x128xf32> to vector<32x128xf32>
    %8 = arith.addf %5, %7 : vector<32x128xf32>
    %9 = arith.mulf %8, %8 : vector<32x128xf32>
    %10 = arith.mulf %8, %9 : vector<32x128xf32>
    %cst_6 = arith.constant 4.471500e-02 : f32
    %11 = vector.broadcast %cst_6 : f32 to vector<32x128xf32>
    %12 = arith.mulf %11, %10 : vector<32x128xf32>
    %13 = arith.addf %8, %12 : vector<32x128xf32>
    %cst_7 = arith.constant 0.797884583 : f32
    %14 = vector.broadcast %cst_7 : f32 to vector<32x128xf32>
    %15 = arith.mulf %14, %13 : vector<32x128xf32>
    %16 = math.tanh %15 : vector<32x128xf32>
    %cst_8 = arith.constant 1.000000e+00 : f32
    %17 = vector.broadcast %cst_8 : f32 to vector<32x128xf32>
    %18 = arith.addf %17, %16 : vector<32x128xf32>
    %cst_9 = arith.constant 5.000000e-01 : f32
    %19 = vector.broadcast %cst_9 : f32 to vector<32x128xf32>
    %20 = arith.mulf %19, %18 : vector<32x128xf32>
    %21 = arith.mulf %8, %20 : vector<32x128xf32>
    %c0_10 = arith.constant 0 : index
    %c0_11 = arith.constant 0 : index
    %22 = vector.load %arg8[%c0_10, %c0_11] : memref<32x128xf32, #tpu.memory_space<vmem>>, vector<32x128xf32>
    %23 = arith.truncf %21 : vector<32x128xf32> to vector<32x128xbf16>
    %c0_12 = arith.constant 0 : index
    %c0_13 = arith.constant 0 : index
    %24 = vector.load %arg5[%c0_12, %c0_13] : memref<128x128xbf16, #tpu.memory_space<vmem>>, vector<128x128xbf16>
    %cst_14 = arith.constant dense<0.000000e+00> : vector<32x128xf32>
    %25 = tpu.matmul %23, %24, %cst_14 {dimension_numbers = #tpu.dot_dimension_numbers<[1], [0], [0], [1], [0, 0, 1, 1], [], []>} : vector<32x128xbf16>, vector<128x128xbf16>, vector<32x128xf32> -> vector<32x128xf32>
    %26 = arith.addf %22, %25 : vector<32x128xf32>
    %c0_15 = arith.constant 0 : index
    %c0_16 = arith.constant 0 : index
    %27 = vector.load %arg8[%c0_15, %c0_16] : memref<32x128xf32, #tpu.memory_space<vmem>>, vector<32x128xf32>
    tpu.vector_store %arg8[%c0_15, %c0_16], %26 {strides = array<i32>} : memref<32x128xf32, #tpu.memory_space<vmem>>, vector<32x128xf32>,
    %c1_i32 = arith.constant 1 : i32
    %28 = arith.cmpi eq, %arg1, %c1_i32 : i32
    %29 = arith.extui %28 : i1 to i32
    %c0_i32_17 = arith.constant 0 : i32
    %30 = arith.cmpi ne, %29, %c0_i32_17 : i32
    scf.if %30 {
      %c0_18 = arith.constant 0 : index
      %c0_19 = arith.constant 0 : index
      %31 = vector.load %arg8[%c0_18, %c0_19] : memref<32x128xf32, #tpu.memory_space<vmem>>, vector<32x128xf32>
      %c0_20 = arith.constant 0 : index
      %c0_21 = arith.constant 0 : index
      %32 = vector.load %arg6[%c0_20, %c0_21] : memref<1x128xf32, #tpu.memory_space<vmem>>, vector<1x128xf32>
      %33 = vector.broadcast %32 : vector<1x128xf32> to vector<32x128xf32>
      %34 = arith.addf %31, %33 : vector<32x128xf32>
      %c0_22 = arith.constant 0 : index
      %c0_23 = arith.constant 0 : index
      %35 = vector.load %arg7[%c0_22, %c0_23] : memref<32x128xf32, #tpu.memory_space<vmem>>, vector<32x128xf32>
      tpu.vector_store %arg7[%c0_22, %c0_23], %34 {strides = array<i32>} : memref<32x128xf32, #tpu.memory_space<vmem>>, vector<32x128xf32>,
    } else {
    }
    return
  }
  func.func @transform_0(%arg0: i32, %arg1: i32) -> (i32, i32) {
    %c0_i32 = arith.constant 0 : i32
    %c0_i32_0 = arith.constant 0 : i32
    return %arg0, %c0_i32 : i32, i32
  }
  func.func @transform_1(%arg0: i32, %arg1: i32) -> (i32, i32) {
    %c0_i32 = arith.constant 0 : i32
    %c0_i32_0 = arith.constant 0 : i32
    return %c0_i32, %arg1 : i32, i32
  }
  func.func @transform_2(%arg0: i32, %arg1: i32) -> (i32, i32) {
    %c0_i32 = arith.constant 0 : i32
    %c0_i32_0 = arith.constant 0 : i32
    return %c0_i32, %arg1 : i32, i32
  }
  func.func @transform_3(%arg0: i32, %arg1: i32) -> (i32, i32) {
    %c0_i32 = arith.constant 0 : i32
    %c0_i32_0 = arith.constant 0 : i32
    return %arg1, %c0_i32 : i32, i32
  }
  func.func @transform_4(%arg0: i32, %arg1: i32) -> (i32, i32) {
    %c0_i32 = arith.constant 0 : i32
    %c0_i32_0 = arith.constant 0 : i32
    %c0_i32_1 = arith.constant 0 : i32
    return %c0_i32, %c0_i32_0 : i32, i32
  }
  func.func @transform_5(%arg0: i32, %arg1: i32) -> (i32, i32) {
    %c0_i32 = arith.constant 0 : i32
    %c0_i32_0 = arith.constant 0 : i32
    return %arg0, %c0_i32 : i32, i32
  }
}

</mosaic_0001>

<llo_original>
// kernel: tpu_custom_call.1
$region0: #{tpu_custom_call.1}
  #allocation0 [shape = 'u32[]', space=smem, size = 0x4, offset = 0x4, fixed_abs, tag = 'smem constant byte address 0x4 - core index']
  #allocation1 [shape = 'u32[72,128]{1,0:T(1,128)}', space=vmem, size = 0x9000, scoped, tag = 'internal scratch']
  #allocation2 [shape = 'f32[32,128]{1,0:T(8,128)}', space=vmem, size = 0x4000, scoped, tag = 'scratch operand']
  %s0 = inlined_call_operand.hbm [shape: bf16[64,128], index: 0, kind: input, shape index: {}]
  %s1 = inlined_call_operand.hbm [shape: bf16[128,256], index: 1, kind: input, shape index: {}]
  %s2 = inlined_call_operand.hbm [shape: f32[1,256], index: 2, kind: input, shape index: {}]
  %s3 = inlined_call_operand.hbm [shape: bf16[256,128], index: 3, kind: input, shape index: {}]
  %s4 = inlined_call_operand.vmem [shape: f32[1,128], index: 4, kind: input, shape index: {}]
  %s5 = inlined_call_operand.hbm [shape: f32[64,128], index: 5, kind: output, shape index: {}]
  %s6 = sld [smem:[#allocation0]]
  $region77: #{tpu_custom_call.1} parent=0
    _
  %s8 = ssub.s32 1, %s6
  %s9 = scalar_select 0, %s8, %s6
  $region1: #{tpu_custom_call.1} parent=0
    #allocation3 [shape = 'u8[16384]{0}', space=vmem, size = 0x4000, scoped, tag = 'input window, operand 0']
    #allocation4 [shape = 's32[2]{0}', space=sflag, size = 0x8, scoped, tag = 'scoped memory for tpu_custom_call.1']
    #allocation5 [shape = 's32[2]{0}', space=sflag, size = 0x8, scoped, tag = 'scoped memory for tpu_custom_call.1']
    #allocation6 [shape = 'u8[65536]{0}', space=vmem, size = 0x10000, scoped, tag = 'input window, operand 1']
    #allocation7 [shape = 's32[2]{0}', space=sflag, size = 0x8, scoped, tag = 'scoped memory for tpu_custom_call.1']
    #allocation8 [shape = 'u8[1024]{0}', space=vmem, size = 0x400, scoped, tag = 'input window, operand 2']
    #allocation9 [shape = 'u8[65536]{0}', space=vmem, size = 0x10000, scoped, tag = 'input window, operand 3']
    #allocation10 [shape = 's32[2]{0}', space=sflag, size = 0x8, scoped, tag = 'scoped memory for tpu_custom_call.1']
    #allocation11 [shape = 'u8[32768]{0}', space=vmem, size = 0x8000, scoped, tag = 'output window, operand 0']
    %10 = vsyncpa [#allocation4], 0
    %s11 = scalar_lea.sflag [#allocation4], 1
    %12 = vsyncpa %s11, 0
    %13 = vsyncpa [#allocation7], 0
    %s14 = scalar_lea.sflag [#allocation7], 1
    %15 = vsyncpa %s14, 0
    %16 = vsyncpa [#allocation10], 0
    %s17 = scalar_lea.sflag [#allocation10], 1
    %18 = vsyncpa %s17, 0
    %19 = vsyncpa [#allocation5], 0
    %s20 = scalar_lea.sflag [#allocation5], 1
    %21 = vsyncpa %s20, 0
    loop: start=0, step=1, limit=6
    $region2: #{tpu_custom_call.1} parent=1 // loop_pre_header
      _
    $region3: #{tpu_custom_call.1} parent=1 // loop_header
      %s23 = sphi 0, %s27
      %p24 = scmp.ge.s32.totalorder %s23, 6
      %s30 = sphi 0, %s42
      %s31 = sphi 0, %s38
      %s32 = sphi 0, %s30
      %s33 = sphi 0, %s31
      %s34 = sphi 0, %s32
      %s35 = sphi 0, %s33
      %s45 = sphi 0, %s47
      %s48 = sphi 0, %s45
      %s49 = sphi 0, %s48
      %s65 = sphi 0, %s49
      %s71 = sphi 0, %s73
      %s74 = sphi 0, %s71
      %s75 = sphi 0, %s74
      %s91 = sphi 0, %s75
      %s97 = sphi 0, %s99
      %s100 = sphi 0, %s97
      %s101 = sphi 0, %s100
      %s117 = sphi 0, %s101
      %s123 = sphi 0, %s125
      %s126 = sphi 0, %s123
      %s127 = sphi 0, %s126
      %s143 = sphi 0, %s127
      %s147 = sphi 0, %s147
      %s149 = sphi 0, %s147
      %s150 = sphi 0, %s149
      %s164 = sphi 0, %s150
      %s170 = sphi 0, %s172
      %s173 = sphi 0, %s170
      %s174 = sphi 0, %s173
      %s190 = sphi 0, %s174
    $region4: #{tpu_custom_call.1} parent=1 // loop_header_branch
      %26 = sbr.rel (%p24) target = $region8
    $region5: #{tpu_custom_call.1} parent=1 // loop_body
      %s28 = ssub.s32 %s23, 1
      %s29 = ssub.s32 %s23, 2
      %s36 = sadd.s32 1, %s31
      %p37 = scmp.ge.s32.totalorder %s36, 2
      %s38 = scalar_select %p37, 0, %s36
      %s39 = sadd.s32 1, %s30
      %s40 = scalar_select %p37, %s39, %s30
      %p41 = scmp.ge.s32.totalorder %s40, 2
      %s42 = scalar_select %p41, 0, %s40
      %s43 = ssub.s32 %s30, %s42
      %p44 = scmp.eq.s32.totalorder %s43, 0
      %s46 = sadd.s32 %s45, 1
      %s47 = scalar_select %p44, %s45, %s46
      %p50 = pneg %p44
      %p51 = scmp.eq.s32.totalorder %s23, 3
      %p52 = por %p50, %p51
      %p53 = scmp.ne.s32.totalorder %s45, %s48
      %p54 = scmp.eq.s32.totalorder %s23, 0
      %p55 = por %p53, %p54
      %p56 = scmp.ne.s32.totalorder %s45, %s48
      %p57 = scmp.eq.s32.totalorder %s28, 3
      %p58 = por %p56, %p57
      %p59 = scmp.ne.s32.totalorder %s48, %s49
      %p60 = scmp.eq.s32.totalorder %s28, 0
      %p61 = por %p59, %p60
      %p62 = scmp.ne.s32.totalorder %s48, %s49
      %p63 = scmp.eq.s32.totalorder %s29, 3
      %p64 = por %p62, %p63
      %p66 = scmp.ne.s32.totalorder %s49, %s65
      %p67 = scmp.eq.s32.totalorder %s29, 0
      %p68 = por %p66, %p67
      %s69 = ssub.s32 %s31, %s38
      %p70 = scmp.eq.s32.totalorder %s69, 0
      %s72 = sadd.s32 %s71, 1
      %s73 = scalar_select %p70, %s71, %s72
      %p76 = pneg %p70
      %p77 = scmp.eq.s32.totalorder %s23, 3
      %p78 = por %p76, %p77
      %p79 = scmp.ne.s32.totalorder %s71, %s74
      %p80 = scmp.eq.s32.totalorder %s23, 0
      %p81 = por %p79, %p80
      %p82 = scmp.ne.s32.totalorder %s71, %s74
      %p83 = scmp.eq.s32.totalorder %s28, 3
      %p84 = por %p82, %p83
      %p85 = scmp.ne.s32.totalorder %s74, %s75
      %p86 = scmp.eq.s32.totalorder %s28, 0
      %p87 = por %p85, %p86
      %p88 = scmp.ne.s32.totalorder %s74, %s75
      %p89 = scmp.eq.s32.totalorder %s29, 3
      %p90 = por %p88, %p89
      %p92 = scmp.ne.s32.totalorder %s75, %s91
      %p93 = scmp.eq.s32.totalorder %s29, 0
      %p94 = por %p92, %p93
      %s95 = ssub.s32 %s31, %s38
      %p96 = scmp.eq.s32.totalorder %s95, 0
      %s98 = sadd.s32 %s97, 1
      %s99 = scalar_select %p96, %s97, %s98
      %p102 = pneg %p96
      %p103 = scmp.eq.s32.totalorder %s23, 3
      %p104 = por %p102, %p103
      %p105 = scmp.ne.s32.totalorder %s97, %s100
      %p106 = scmp.eq.s32.totalorder %s23, 0
      %p107 = por %p105, %p106
      %p108 = scmp.ne.s32.totalorder %s97, %s100
      %p109 = scmp.eq.s32.totalorder %s28, 3
      %p110 = por %p108, %p109
      %p111 = scmp.ne.s32.totalorder %s100, %s101
      %p112 = scmp.eq.s32.totalorder %s28, 0
      %p113 = por %p111, %p112
      %p114 = scmp.ne.s32.totalorder %s100, %s101
      %p115 = scmp.eq.s32.totalorder %s29, 3
      %p116 = por %p114, %p115
      %p118 = scmp.ne.s32.totalorder %s101, %s117
      %p119 = scmp.eq.s32.totalorder %s29, 0
      %p120 = por %p118, %p119
      %s121 = ssub.s32 %s31, %s38
      %p122 = scmp.eq.s32.totalorder %s121, 0
      %s124 = sadd.s32 %s123, 1
      %s125 = scalar_select %p122, %s123, %s124
      %p128 = pneg %p122
      %p129 = scmp.eq.s32.totalorder %s23, 3
      %p130 = por %p128, %p129
      %p131 = scmp.ne.s32.totalorder %s123, %s126
      %p132 = scmp.eq.s32.totalorder %s23, 0
      %p133 = por %p131, %p132
      %p134 = scmp.ne.s32.totalorder %s123, %s126
      %p135 = scmp.eq.s32.totalorder %s28, 3
      %p136 = por %p134, %p135
      %p137 = scmp.ne.s32.totalorder %s126, %s127
      %p138 = scmp.eq.s32.totalorder %s28, 0
      %p139 = por %p137, %p138
      %p140 = scmp.ne.s32.totalorder %s126, %s127
      %p141 = scmp.eq.s32.totalorder %s29, 3
      %p142 = por %p140, %p141
      %p144 = scmp.ne.s32.totalorder %s127, %s143
      %p145 = scmp.eq.s32.totalorder %s29, 0
      %p146 = por %p144, %p145
      %s148 = sadd.s32 %s147, 1
      %p151 = scmp.eq.s32.totalorder %s23, 3
      %p152 = scmp.ne.s32.totalorder %s147, %s149
      %p153 = scmp.eq.s32.totalorder %s23, 0
      %p154 = por %p152, %p153
      %p155 = scmp.ne.s32.totalorder %s147, %s149
      %p156 = scmp.eq.s32.totalorder %s28, 3
      %p157 = por %p155, %p156
      %p158 = scmp.ne.s32.totalorder %s149, %s150
      %p159 = scmp.eq.s32.totalorder %s28, 0
      %p160 = por %p158, %p159
      %p161 = scmp.ne.s32.totalorder %s149, %s150
      %p162 = scmp.eq.s32.totalorder %s29, 3
      %p163 = por %p161, %p162
      %p165 = scmp.ne.s32.totalorder %s150, %s164
      %p166 = scmp.eq.s32.totalorder %s29, 0
      %p167 = por %p165, %p166
      %s168 = ssub.s32 %s30, %s42
      %p169 = scmp.eq.s32.totalorder %s168, 0
      %s171 = sadd.s32 %s170, 1
      %s172 = scalar_select %p169, %s170, %s171
      %p175 = pneg %p169
      %p176 = scmp.eq.s32.totalorder %s23, 3
      %p177 = por %p175, %p176
      %p178 = scmp.ne.s32.totalorder %s170, %s173
      %p179 = scmp.eq.s32.totalorder %s23, 0
      %p180 = por %p178, %p179
      %p181 = scmp.ne.s32.totalorder %s170, %s173
      %p182 = scmp.eq.s32.totalorder %s28, 3
      %p183 = por %p181, %p182
      %p184 = scmp.ne.s32.totalorder %s173, %s174
      %p185 = scmp.eq.s32.totalorder %s28, 0
      %p186 = por %p184, %p185
      %p187 = scmp.ne.s32.totalorder %s173, %s174
      %p188 = scmp.eq.s32.totalorder %s29, 3
      %p189 = por %p187, %p188
      %p191 = scmp.ne.s32.totalorder %s174, %s190
      %p192 = scmp.eq.s32.totalorder %s29, 0
      %p193 = por %p191, %p192
      %p194 = scmp.le.s32.totalorder 1, %s23
      %p195 = scmp.lt.s32.totalorder %s23, 5
      %p196 = pnand %p194, %p195
      %p197 = pneg %p196
      // Predicated region
      $region9: #{tpu_custom_call.1} parent=5 // pred_check
        _
      $region10: #{tpu_custom_call.1} parent=5 // pred_check_branch
        %199 = sbr.rel (%p196) target = $region12
      $region11: #{tpu_custom_call.1} parent=5 // pred_region
        %s200 = ssub.s32 %s23, 1
        // Predicated region
        $region13: #{tpu_custom_call.1} parent=11 // pred_check
          %p201 = pneg %p160
        $region14: #{tpu_custom_call.1} parent=11 // pred_check_branch
          %203 = sbr.rel (%p201) target = $region16
        $region15: #{tpu_custom_call.1} parent=11 // pred_region
          _
        $region16: #{tpu_custom_call.1} parent=11 // pred_fallthru
          _
      $region12: #{tpu_custom_call.1} parent=5 // pred_fallthru
        _
      %p204 = scmp.lt.s32.totalorder %s23, 4
      // Predicated region
      $region17: #{tpu_custom_call.1} parent=5 // pred_check
        %p205 = pneg %p204
      $region18: #{tpu_custom_call.1} parent=5 // pred_check_branch
        %207 = sbr.rel (%p205) target = $region20
      $region19: #{tpu_custom_call.1} parent=5 // pred_region
        // Predicated region
        $region21: #{tpu_custom_call.1} parent=19 // pred_check
          %p208 = pneg %p55
        $region22: #{tpu_custom_call.1} parent=19 // pred_check_branch
          %210 = sbr.rel (%p208) target = $region24
        $region23: #{tpu_custom_call.1} parent=19 // pred_region
          %s211 = sand.u32 %s45, 1
          %s212 = scalar_lea.sflag [#allocation4], %s211
          %s213 = sand.u32 %s45, 1
          %s214 = smul.addr %s213, 16
          %s215 = scalar_lea.vmem [#allocation3], %s214
          %s216 = smul.u32 4, %s30
          %218 = vsyncadd %s212, 0
          %s219 = smul.addr %s216, 4
          %s220 = scalar_lea.hbm %s0, %s219
          %s221 = sshll.u32 %s220, 4
          %s222 = int_to_ptr.hbm [resolvable:$true] %s221
          %s223 = sshll.u32 %s215, 4
          %s224 = int_to_ptr.vmem [resolvable:$true] %s223
          %229 = dma.hbm_to_vmem [thread:$0]  %s222, 256, %s224, %s212, 64, 64, 4
        $region24: #{tpu_custom_call.1} parent=19 // pred_fallthru
          _
        // Predicated region
        $region25: #{tpu_custom_call.1} parent=19 // pred_check
          %p230 = pneg %p81
        $region26: #{tpu_custom_call.1} parent=19 // pred_check_branch
          %232 = sbr.rel (%p230) target = $region28
        $region27: #{tpu_custom_call.1} parent=19 // pred_region
          %s233 = sand.u32 %s23, 1
          %s234 = scalar_lea.sflag [#allocation7], %s233
          %s235 = sand.u32 %s71, 1
          %s236 = smul.addr %s235, 64
          %s237 = scalar_lea.vmem [#allocation6], %s236
          %239 = vsyncadd %s234, 0
          %s240 = smul.addr %s31, 4
          %s241 = scalar_lea.hbm %s1, %s240
          %s242 = sshll.u32 %s241, 4
          %s243 = int_to_ptr.hbm [resolvable:$true] %s242
          %s244 = sshll.u32 %s237, 4
          %s245 = int_to_ptr.vmem [resolvable:$true] %s244
          %250 = dma.hbm_to_vmem [thread:$0]  %s243, 1024, %s245, %s234, 128, 64, 4
        $region28: #{tpu_custom_call.1} parent=19 // pred_fallthru
          _
        // Predicated region
        $region29: #{tpu_custom_call.1} parent=19 // pred_check
          %p251 = pneg %p107
        $region30: #{tpu_custom_call.1} parent=19 // pred_check_branch
          %253 = sbr.rel (%p251) target = $region32
        $region31: #{tpu_custom_call.1} parent=19 // pred_region
          %s254 = sand.u32 %s23, 1
          %s255 = scalar_lea.sflag [#allocation7], %s254
          %s256 = sand.u32 %s97, 1
          %s257 = scalar_lea.vmem [#allocation8], %s256
          %259 = vsyncadd %s255, 0
          %s260 = scalar_lea.hbm %s2, %s31
          %s262 = sshll.u32 %s260, 4
          %s263 = int_to_ptr.hbm [resolvable:$true] %s262
          %s264 = sshll.u32 %s257, 4
          %s265 = int_to_ptr.vmem [resolvable:$true] %s264
          %267 = dma.hbm_to_vmem [thread:$0]  %s263, 16, %s265, %s255
        $region32: #{tpu_custom_call.1} parent=19 // pred_fallthru
          _
        // Predicated region
        $region33: #{tpu_custom_call.1} parent=19 // pred_check
          %p268 = pneg %p133
        $region34: #{tpu_custom_call.1} parent=19 // pred_check_branch
          %270 = sbr.rel (%p268) target = $region36
        $region35: #{tpu_custom_call.1} parent=19 // pred_region
          %s271 = sand.u32 %s123, 1
          %s272 = scalar_lea.sflag [#allocation10], %s271
          %s273 = sand.u32 %s123, 1
          %s274 = smul.addr %s273, 64
          %s275 = scalar_lea.vmem [#allocation9], %s274
          %s276 = smul.u32 16, %s31
          %278 = vsyncadd %s272, 0
          %s279 = smul.addr %s276, 4
          %s280 = scalar_lea.hbm %s3, %s279
          %s281 = sshll.u32 %s280, 4
          %s282 = int_to_ptr.hbm [resolvable:$true] %s281
          %s283 = sshll.u32 %s275, 4
          %s284 = int_to_ptr.vmem [resolvable:$true] %s283
          %289 = dma.hbm_to_vmem [thread:$0]  %s282, 1024, %s284, %s272, 64, 64, 4
        $region36: #{tpu_custom_call.1} parent=19 // pred_fallthru
          _
      $region20: #{tpu_custom_call.1} parent=5 // pred_fallthru
        _
      %p290 = scmp.le.s32.totalorder 1, %s23
      %p291 = scmp.lt.s32.totalorder %s23, 5
      %p292 = pnand %p290, %p291
      %p293 = pneg %p292
      // Predicated region
      $region37: #{tpu_custom_call.1} parent=5 // pred_check
        _
      $region38: #{tpu_custom_call.1} parent=5 // pred_check_branch
        %295 = sbr.rel (%p292) target = $region40
      $region39: #{tpu_custom_call.1} parent=5 // pred_region
        %s296 = ssub.s32 %s23, 1
        %s297 = sand.u32 %s48, 1
        %s298 = scalar_lea.sflag [#allocation4], %s297
        %s299 = sand.u32 %s48, 1
        %s300 = smul.addr %s299, 16
        %s301 = scalar_lea.vmem [#allocation3], %s300
        // Predicated region
        $region41: #{tpu_custom_call.1} parent=39 // pred_check
          %p302 = pneg %p61
        $region42: #{tpu_custom_call.1} parent=39 // pred_check_branch
          %304 = sbr.rel (%p302) target = $region44
        $region43: #{tpu_custom_call.1} parent=39 // pred_region
          %306 = dma.done %s298, 256
        $region44: #{tpu_custom_call.1} parent=39 // pred_fallthru
          _
        %s307 = sand.u32 %s28, 1
        %s308 = scalar_lea.sflag [#allocation7], %s307
        %s309 = sand.u32 %s74, 1
        %s310 = smul.addr %s309, 64
        %s311 = scalar_lea.vmem [#allocation6], %s310
        // Predicated region
        $region45: #{tpu_custom_call.1} parent=39 // pred_check
          %p312 = pneg %p87
        $region46: #{tpu_custom_call.1} parent=39 // pred_check_branch
          %314 = sbr.rel (%p312) target = $region48
        $region47: #{tpu_custom_call.1} parent=39 // pred_region
          %316 = dma.done %s308, 1024
        $region48: #{tpu_custom_call.1} parent=39 // pred_fallthru
          _
        %s317 = sand.u32 %s28, 1
        %s318 = scalar_lea.sflag [#allocation7], %s317
        %s319 = sand.u32 %s100, 1
        %s320 = scalar_lea.vmem [#allocation8], %s319
        // Predicated region
        $region49: #{tpu_custom_call.1} parent=39 // pred_check
          %p321 = pneg %p113
        $region50: #{tpu_custom_call.1} parent=39 // pred_check_branch
          %323 = sbr.rel (%p321) target = $region52
        $region51: #{tpu_custom_call.1} parent=39 // pred_region
          %325 = dma.done %s318, 16
        $region52: #{tpu_custom_call.1} parent=39 // pred_fallthru
          _
        %s326 = sand.u32 %s126, 1
        %s327 = scalar_lea.sflag [#allocation10], %s326
        %s328 = sand.u32 %s126, 1
        %s329 = smul.addr %s328, 64
        %s330 = scalar_lea.vmem [#allocation9], %s329
        // Predicated region
        $region53: #{tpu_custom_call.1} parent=39 // pred_check
          %p331 = pneg %p139
        $region54: #{tpu_custom_call.1} parent=39 // pred_check_branch
          %333 = sbr.rel (%p331) target = $region56
        $region55: #{tpu_custom_call.1} parent=39 // pred_region
          %335 = dma.done %s327, 1024
        $region56: #{tpu_custom_call.1} parent=39 // pred_fallthru
          _
        %s336 = sand.u32 %s48, 1
        %s337 = scalar_lea.sflag [#allocation4], %s336
        %s338 = sand.u32 %s48, 1
        %s339 = smul.addr %s338, 16
        %s340 = scalar_lea.vmem [#allocation3], %s339
        %p341 = pneg %p61
        %p342 = pneg %p58
        %s343 = sand.u32 %s28, 1
        %s344 = scalar_lea.sflag [#allocation7], %s343
        %s345 = sand.u32 %s74, 1
        %s346 = smul.addr %s345, 64
        %s347 = scalar_lea.vmem [#allocation6], %s346
        %p348 = pneg %p87
        %p349 = pneg %p84
        %s350 = sand.u32 %s28, 1
        %s351 = scalar_lea.sflag [#allocation7], %s350
        %s352 = sand.u32 %s100, 1
        %s353 = scalar_lea.vmem [#allocation8], %s352
        %p354 = pneg %p113
        %p355 = pneg %p110
        %s356 = sand.u32 %s126, 1
        %s357 = scalar_lea.sflag [#allocation10], %s356
        %s358 = sand.u32 %s126, 1
        %s359 = smul.addr %s358, 64
        %s360 = scalar_lea.vmem [#allocation9], %s359
        %p361 = pneg %p139
        %p362 = pneg %p136
        %p363 = pneg %p160
        %p364 = pneg %p157
        %p365 = pneg %p186
        %p366 = pneg %p183
        %s367 = sand.u32 %s173, 1
        %s368 = scalar_lea.sflag [#allocation5], %s367
        %s369 = sand.u32 %s173, 1
        %s370 = smul.addr %s369, 32
        %s371 = scalar_lea.vmem [#allocation11], %s370
        %s372 = smul.u32 4, %s32
        %s373 = smul.u32 16, %s33
        %s374 = smul.u32 4, %s32
        %p375 = scmp.eq.s32.totalorder %s33, 0
        // Predicated region
        $region57: #{tpu_custom_call.1} parent=39 // pred_check
          %p376 = pneg %p375
        $region58: #{tpu_custom_call.1} parent=39 // pred_check_branch
          %378 = sbr.rel (%p376) target = $region60
        $region59: #{tpu_custom_call.1} parent=39 // pred_region
          %379 = vst [vmem:[#allocation2] sm:$0xff] 0.0
          %380 = vst [vmem:[#allocation2 + $0x8] sm:$0xff] 0.0
          %381 = vst [vmem:[#allocation2 + $0x10] sm:$0xff] 0.0
          %382 = vst [vmem:[#allocation2 + $0x18] sm:$0xff] 0.0
        $region60: #{tpu_custom_call.1} parent=39 // pred_fallthru
          _
        %v383 = vld [vmem:[%s301] sm:$0xf]
        %v384 = vld [vmem:[%s301 + $0x4] sm:$0xf]
        %v385 = vld [vmem:[%s301 + $0x8] sm:$0xf]
        %v386 = vld [vmem:[%s301 + $0xc] sm:$0xf]
        %v387 = vld [vmem:[%s311] sm:$0xf]
        %v388 = vld [vmem:[%s311 + $0x4] sm:$0xf]
        %v389 = vld [vmem:[%s311 + $0x8] sm:$0xf]
        %v390 = vld [vmem:[%s311 + $0xc] sm:$0xf]
        %v391 = vld [vmem:[%s311 + $0x10] sm:$0xf]
        %v392 = vld [vmem:[%s311 + $0x14] sm:$0xf]
        %v393 = vld [vmem:[%s311 + $0x18] sm:$0xf]
        %v394 = vld [vmem:[%s311 + $0x1c] sm:$0xf]
        %v395 = vld [vmem:[%s311 + $0x20] sm:$0xf]
        %v396 = vld [vmem:[%s311 + $0x24] sm:$0xf]
        %v397 = vld [vmem:[%s311 + $0x28] sm:$0xf]
        %v398 = vld [vmem:[%s311 + $0x2c] sm:$0xf]
        %v399 = vld [vmem:[%s311 + $0x30] sm:$0xf]
        %v400 = vld [vmem:[%s311 + $0x34] sm:$0xf]
        %v401 = vld [vmem:[%s311 + $0x38] sm:$0xf]
        %v402 = vld [vmem:[%s311 + $0x3c] sm:$0xf]
        %v403 = vld [vmem:[%s320] sm:$0x1]
        %v405 = vperm.slane %v403, 0
        %v411 = vunpack.c.l.b16 %v383
        %v412 = vunpack.c.l.b16 %v384
        %v413 = vunpack.c.l.b16 %v385
        %v414 = vunpack.c.l.b16 %v386
        %v415 = vpack.c.b16 %v412, %v411
        %v416 = vpack.c.b16 %v414, %v413
        %v435 = vunpack.c.l.b16 %v387
        %v436 = vunpack.c.l.b16 %v388
        %v437 = vunpack.c.l.b16 %v389
        %v438 = vunpack.c.l.b16 %v390
        %v439 = vunpack.c.l.b16 %v391
        %v440 = vunpack.c.l.b16 %v392
        %v441 = vunpack.c.l.b16 %v393
        %v442 = vunpack.c.l.b16 %v394
        %v443 = vunpack.c.l.b16 %v395
        %v444 = vunpack.c.l.b16 %v396
        %v445 = vunpack.c.l.b16 %v397
        %v446 = vunpack.c.l.b16 %v398
        %v447 = vunpack.c.l.b16 %v399
        %v448 = vunpack.c.l.b16 %v400
        %v449 = vunpack.c.l.b16 %v401
        %v450 = vunpack.c.l.b16 %v402
        %v451 = vpack.c.b16 %v436, %v435
        %v452 = vpack.c.b16 %v438, %v437
        %v453 = vpack.c.b16 %v440, %v439
        %v454 = vpack.c.b16 %v442, %v441
        %v455 = vpack.c.b16 %v444, %v443
        %v456 = vpack.c.b16 %v446, %v445
        %v457 = vpack.c.b16 %v448, %v447
        %v458 = vpack.c.b16 %v450, %v449
        %467 = vmatpush.bf16.msra.mxu0 %v458
        %468 = vmatpush.bf16.msra.mxu0 %v457
        %469 = vmatpush.bf16.msra.mxu0 %v456
        %470 = vmatpush.bf16.msra.mxu0 %v455
        %471 = vmatpush.bf16.msra.mxu0 %v454
        %472 = vmatpush.bf16.msra.mxu0 %v453
        %473 = vmatpush.bf16.msra.mxu0 %v452
        %474 = vmatpush.bf16.msra.mxu0 %v451
        %475 = vmatmul.bf16.gmra.mxu0 %v415
        %v476 = vpop.f32.mrf.mxu0
        %v477 = vadd.f32 %v405, %v476
        %v478 = vpop.f32.mrf.mxu0
        %v479 = vadd.f32 %v405, %v478
        %480 = vmatmul.bf16.gmra.mxu0 %v416
        %v481 = vpop.f32.mrf.mxu0
        %v482 = vadd.f32 %v405, %v481
        %v483 = vpop.f32.mrf.mxu0
        %v484 = vadd.f32 %v405, %v483
        %485 = vdwg.mxu0
        %v486 = vmul.f32 %v477, %v477
        %v487 = vmul.f32 %v479, %v479
        %v488 = vmul.f32 %v482, %v482
        %v489 = vmul.f32 %v484, %v484
        %v490 = vmul.f32 %v477, %v486
        %v491 = vmul.f32 %v479, %v487
        %v492 = vmul.f32 %v482, %v488
        %v493 = vmul.f32 %v484, %v489
        %v494 = vmul.f32 %v490, 0.044715
        %v495 = vmul.f32 %v491, 0.044715
        %v496 = vmul.f32 %v492, 0.044715
        %v497 = vmul.f32 %v493, 0.044715
        %v498 = vadd.f32 %v477, %v494
        %v499 = vadd.f32 %v479, %v495
        %v500 = vadd.f32 %v482, %v496
        %v501 = vadd.f32 %v484, %v497
        %v502 = vmul.f32 %v498, 0.7978846
        %v503 = vmul.f32 %v499, 0.7978846
        %v504 = vmul.f32 %v500, 0.7978846
        %v505 = vmul.f32 %v501, 0.7978846
        %v506 = vtanh.pop %v502
        %v507 = vtanh.pop %v503
        %v508 = vtanh.pop %v504
        %v509 = vtanh.pop %v505
        %v510 = vadd.f32 %v506, 1.0
        %v511 = vadd.f32 %v507, 1.0
        %v512 = vadd.f32 %v508, 1.0
        %v513 = vadd.f32 %v509, 1.0
        %v514 = vmul.f32 %v510, 0.5
        %v515 = vmul.f32 %v511, 0.5
        %v516 = vmul.f32 %v512, 0.5
        %v517 = vmul.f32 %v513, 0.5
        %v518 = vmul.f32 %v477, %v514
        %v519 = vmul.f32 %v479, %v515
        %v520 = vmul.f32 %v482, %v516
        %v521 = vmul.f32 %v484, %v517
        %v522 = vld [vmem:[#allocation2] sm:$0xff]
        %v523 = vld [vmem:[#allocation2 + $0x8] sm:$0xff]
        %v524 = vld [vmem:[#allocation2 + $0x10] sm:$0xff]
        %v525 = vld [vmem:[#allocation2 + $0x18] sm:$0xff]
        %v526 = vpack.c.bf16 %v519, %v518
        %v527 = vpack.c.bf16 %v521, %v520
        %v528 = vld [vmem:[%s330] sm:$0xf]
        %v529 = vld [vmem:[%s330 + $0x4] sm:$0xf]
        %v530 = vld [vmem:[%s330 + $0x8] sm:$0xf]
        %v531 = vld [vmem:[%s330 + $0xc] sm:$0xf]
        %v532 = vld [vmem:[%s330 + $0x10] sm:$0xf]
        %v533 = vld [vmem:[%s330 + $0x14] sm:$0xf]
        %v534 = vld [vmem:[%s330 + $0x18] sm:$0xf]
        %v535 = vld [vmem:[%s330 + $0x1c] sm:$0xf]
        %v536 = vld [vmem:[%s330 + $0x20] sm:$0xf]
        %v537 = vld [vmem:[%s330 + $0x24] sm:$0xf]
        %v538 = vld [vmem:[%s330 + $0x28] sm:$0xf]
        %v539 = vld [vmem:[%s330 + $0x2c] sm:$0xf]
        %v540 = vld [vmem:[%s330 + $0x30] sm:$0xf]
        %v541 = vld [vmem:[%s330 + $0x34] sm:$0xf]
        %v542 = vld [vmem:[%s330 + $0x38] sm:$0xf]
        %v543 = vld [vmem:[%s330 + $0x3c] sm:$0xf]
        %v560 = vunpack.c.l.b16 %v528
        %v561 = vunpack.c.l.b16 %v529
        %v562 = vunpack.c.l.b16 %v530
        %v563 = vunpack.c.l.b16 %v531
        %v564 = vunpack.c.l.b16 %v532
        %v565 = vunpack.c.l.b16 %v533
        %v566 = vunpack.c.l.b16 %v534
        %v567 = vunpack.c.l.b16 %v535
        %v568 = vunpack.c.l.b16 %v536
        %v569 = vunpack.c.l.b16 %v537
        %v570 = vunpack.c.l.b16 %v538
        %v571 = vunpack.c.l.b16 %v539
        %v572 = vunpack.c.l.b16 %v540
        %v573 = vunpack.c.l.b16 %v541
        %v574 = vunpack.c.l.b16 %v542
        %v575 = vunpack.c.l.b16 %v543
        %v576 = vpack.c.b16 %v561, %v560
        %v577 = vpack.c.b16 %v563, %v562
        %v578 = vpack.c.b16 %v565, %v564
        %v579 = vpack.c.b16 %v567, %v566
        %v580 = vpack.c.b16 %v569, %v568
        %v581 = vpack.c.b16 %v571, %v570
        %v582 = vpack.c.b16 %v573, %v572
        %v583 = vpack.c.b16 %v575, %v574
        %592 = vmatpush.bf16.msra.mxu0 %v583
        %593 = vmatpush.bf16.msra.mxu0 %v582
        %594 = vmatpush.bf16.msra.mxu0 %v581
        %595 = vmatpush.bf16.msra.mxu0 %v580
        %596 = vmatpush.bf16.msra.mxu0 %v579
        %597 = vmatpush.bf16.msra.mxu0 %v578
        %598 = vmatpush.bf16.msra.mxu0 %v577
        %599 = vmatpush.bf16.msra.mxu0 %v576
        %600 = vmatmul.bf16.gmra.mxu0 %v526
        %v601 = vpop.f32.mrf.mxu0
        %v602 = vadd.f32 0.0, %v601
        %v603 = vpop.f32.mrf.mxu0
        %v604 = vadd.f32 0.0, %v603
        %605 = vmatmul.bf16.gmra.mxu0 %v527
        %v606 = vpop.f32.mrf.mxu0
        %v607 = vadd.f32 0.0, %v606
        %v608 = vpop.f32.mrf.mxu0
        %v609 = vadd.f32 0.0, %v608
        %610 = vdwg.mxu0
        %v611 = vadd.f32 %v522, %v602
        %v612 = vadd.f32 %v523, %v604
        %v613 = vadd.f32 %v524, %v607
        %v614 = vadd.f32 %v525, %v609
        %615 = vst [vmem:[#allocation2] sm:$0xff] %v611
        %616 = vst [vmem:[#allocation2 + $0x8] sm:$0xff] %v612
        %617 = vst [vmem:[#allocation2 + $0x10] sm:$0xff] %v613
        %618 = vst [vmem:[#allocation2 + $0x18] sm:$0xff] %v614
        %p619 = scmp.eq.s32.totalorder %s33, 1
        // Predicated region
        $region61: #{tpu_custom_call.1} parent=39 // pred_check
          %p620 = pneg %p619
        $region62: #{tpu_custom_call.1} parent=39 // pred_check_branch
          %622 = sbr.rel (%p620) target = $region64
        $region63: #{tpu_custom_call.1} parent=39 // pred_region
          %v623 = vld [vmem:[#allocation2] sm:$0xff]
          %v624 = vld [vmem:[#allocation2 + $0x8] sm:$0xff]
          %v625 = vld [vmem:[#allocation2 + $0x10] sm:$0xff]
          %v626 = vld [vmem:[#allocation2 + $0x18] sm:$0xff]
          %v627 = vld [vmem:[%s4] sm:$0x1]
          %v629 = vperm.slane %v627, 0
          %v631 = vadd.f32 %v623, %v629
          %v632 = vadd.f32 %v624, %v629
          %v633 = vadd.f32 %v625, %v629
          %v634 = vadd.f32 %v626, %v629
          %635 = vst [vmem:[%s371] sm:$0xff] %v631
          %636 = vst [vmem:[%s371 + $0x8] sm:$0xff] %v632
          %637 = vst [vmem:[%s371 + $0x10] sm:$0xff] %v633
          %638 = vst [vmem:[%s371 + $0x18] sm:$0xff] %v634
        $region64: #{tpu_custom_call.1} parent=39 // pred_fallthru
          _
        %s639 = sand.u32 %s173, 1
        %s640 = scalar_lea.sflag [#allocation5], %s639
        %s641 = sand.u32 %s173, 1
        %s642 = smul.addr %s641, 32
        %s643 = scalar_lea.vmem [#allocation11], %s642
        // Predicated region
        $region65: #{tpu_custom_call.1} parent=39 // pred_check
          %p644 = pneg %p183
        $region66: #{tpu_custom_call.1} parent=39 // pred_check_branch
          %646 = sbr.rel (%p644) target = $region68
        $region67: #{tpu_custom_call.1} parent=39 // pred_region
          %s647 = smul.u32 4, %s32
          %649 = vsyncadd %s640, 0
          %s650 = smul.addr %s647, 8
          %s651 = scalar_lea.hbm %s5, %s650
          %s652 = sshll.u32 %s643, 4
          %s653 = int_to_ptr.vmem [resolvable:$true] %s652
          %s654 = sshll.u32 %s651, 4
          %s655 = int_to_ptr.hbm [resolvable:$true] %s654
          %660 = dma.vmem_to_hbm [thread:$0]  %s653, 512, %s655, %s640, 128, 128, 8
        $region68: #{tpu_custom_call.1} parent=39 // pred_fallthru
          _
      $region40: #{tpu_custom_call.1} parent=5 // pred_fallthru
        _
      %p661 = scmp.le.s32.totalorder 2, %s23
      // Predicated region
      $region69: #{tpu_custom_call.1} parent=5 // pred_check
        %p662 = pneg %p661
      $region70: #{tpu_custom_call.1} parent=5 // pred_check_branch
        %664 = sbr.rel (%p662) target = $region72
      $region71: #{tpu_custom_call.1} parent=5 // pred_region
        %s665 = ssub.s32 %s23, 2
        // Predicated region
        $region73: #{tpu_custom_call.1} parent=71 // pred_check
          %p666 = pneg %p189
        $region74: #{tpu_custom_call.1} parent=71 // pred_check_branch
          %668 = sbr.rel (%p666) target = $region76
        $region75: #{tpu_custom_call.1} parent=71 // pred_region
          %s669 = sand.u32 %s174, 1
          %s670 = scalar_lea.sflag [#allocation5], %s669
          %s671 = sand.u32 %s174, 1
          %s672 = smul.addr %s671, 32
          %s673 = scalar_lea.vmem [#allocation11], %s672
          %675 = dma.done %s670, 512
        $region76: #{tpu_custom_call.1} parent=71 // pred_fallthru
          _
      $region72: #{tpu_custom_call.1} parent=5 // pred_fallthru
        _
    $region6: #{tpu_custom_call.1} parent=1 // loop_footer
      %s27 = sadd.s32 1, %s23
    $region7: #{tpu_custom_call.1} parent=1 // loop_footer_branch
      %22 = sbr.rel target = $region3
    $region8: #{tpu_custom_call.1} parent=1 // loop_exit
      _
    %676 = vsyncpa [#allocation4], 1
    %s677 = scalar_lea.sflag [#allocation4], 1
    %678 = vsyncpa %s677, 1
    %679 = vsyncpa [#allocation7], 1
    %s680 = scalar_lea.sflag [#allocation7], 1
    %681 = vsyncpa %s680, 1
    %682 = vsyncpa [#allocation10], 1
    %s683 = scalar_lea.sflag [#allocation10], 1
    %684 = vsyncpa %s683, 1
    %685 = vsyncpa [#allocation5], 1
    %s686 = scalar_lea.sflag [#allocation5], 1
    %687 = vsyncpa %s686, 1

</llo_original>
